<compile_context>
chip_gen: v6e
topology: v6e:2x2x1
jax: 0.10.0
libtpu: 0.0.40
codegen_flags: <defaults>
</compile_context>

<pallas_src>
import functools

import jax
import jax.numpy as jnp
from jax.experimental import pallas as pl
from jax.experimental.pallas import tpu as pltpu


def _softplus(x):
    # Numerically stable softplus (log1p(exp(x)) overflows for large x).
    return jnp.maximum(x, 0.0) + jnp.log1p(jnp.exp(-jnp.abs(x)))


def _bbb_conv2d_kernel(x_ref, wp_ref, bp_ref, o_ref,
                       *, N, KH, KW, Wp, M, M_pad, K):
    # ---- sample weight / bias via reparameterization (VPU/EUP, tiny) ----
    # wp_ref: (3, Cout, K) = [W_mu; W_rho; W_eps],  bp_ref: (3, Cout, 1)
    w = wp_ref[0] + wp_ref[2] * _softplus(wp_ref[1])            # (Cout, K)
    b = bp_ref[0] + bp_ref[2] * _softplus(bp_ref[1])            # (Cout, 1)

    # ---- build the (K, N*M_pad) tap matrix from static lane-offset slices ----
    # Per image: 9 taps concatenated along sublanes (tile-aligned, Cin_p = 8);
    # images concatenated along lanes at 128-aligned offsets (M_pad % 128 == 0).
    cols = []
    if M_pad > M:
        zpad = jnp.zeros((K, M_pad - M), jnp.float32)
    for n in range(N):
        xn = x_ref[n]                                           # (Cin_p, Lflat)
        pieces = []
        for kh in range(KH):
            for kw in range(KW):
                off = kh * Wp + kw                              # static offset
                pieces.append(xn[:, off:off + M])               # (Cin_p, M)
        cols.append(jnp.concatenate(pieces, axis=0))            # (K, M)
        if M_pad > M:
            cols.append(zpad)
    r = jnp.concatenate(cols, axis=1)                           # (K, N*M_pad)

    # ---- single deep MXU matmul: (Cout, K) @ (K, N*M_pad) ----
    acc = jnp.dot(w, r, preferred_element_type=jnp.float32)     # (Cout, N*M_pad)
    res = (acc + b).astype(o_ref.dtype)

    # ---- lane-dense, 128-aligned per-image stores ----
    for n in range(N):
        o_ref[n] = res[:, n * M_pad:(n + 1) * M_pad]            # (Cout, M_pad)


def bbb_conv2d_forward(x_nchw, W_mu, W_rho, W_eps, b_mu, b_rho, b_eps,
                       *, stride=1, padding=1, dilation=1):
    """x_nchw: (N, Cin, H, W); W_*: (Cout, Cin, KH, KW); b_*: (Cout,).
    Returns (N, Cout, OH, OW). Only stride=1, dilation=1, groups=1 supported."""
    if stride != 1 or dilation != 1:
        raise NotImplementedError("Pallas BBB_Conv2d kernel supports stride=1, dilation=1 only")

    N, Cin, H, W = x_nchw.shape
    Cout, _, KH, KW = W_mu.shape
    Hp, Wp = H + 2 * padding, W + 2 * padding
    OH, OW = Hp - KH + 1, Wp - KW + 1
    M = OH * Wp                                  # width-padded flat output length
    M_pad = -(-M // 128) * 128                   # lane-dense output slab per image
    Cin_p = -(-Cin // 8) * 8                     # round channels up to one sublane tile
    K = KH * KW * Cin_p

    # Flat length each tap slice needs: last slice starts at (KH-1)*Wp+(KW-1).
    l_need = (KH - 1) * Wp + (KW - 1) + M
    extra_rows = max(0, -(-(l_need - Hp * Wp) // Wp))
    Lflat = (Hp + extra_rows) * Wp

    # --- one fused pad: channel round-up + spatial halo + flat-slice overhang ---
    x_pad = jnp.pad(x_nchw.astype(jnp.float32),
                    ((0, 0), (0, Cin_p - Cin),
                     (padding, padding + extra_rows), (padding, padding)))
    x_flat = x_pad.reshape(N, Cin_p, Lflat)      # minor-dim merge: no data movement

    # --- pack weight params: (3, Cout, Cin, KH, KW) -> (3, Cout, K), row order (kh, kw, cin) ---
    wpack = jnp.stack([W_mu, W_rho, W_eps]).astype(jnp.float32)
    wpack = jnp.pad(wpack, ((0, 0), (0, 0), (0, Cin_p - Cin), (0, 0), (0, 0)))
    wpack = jnp.transpose(wpack, (0, 1, 3, 4, 2)).reshape(3, Cout, K)

    bpack = jnp.stack([b_mu, b_rho, b_eps]).astype(jnp.float32).reshape(3, Cout, 1)

    kernel = functools.partial(_bbb_conv2d_kernel, N=N, KH=KH, KW=KW, Wp=Wp,
                               M=M, M_pad=M_pad, K=K)

    out = pl.pallas_call(
        kernel,
        out_shape=jax.ShapeDtypeStruct((N, Cout, M_pad), jnp.float32),
        grid_spec=pltpu.PrefetchScalarGridSpec(
            num_scalar_prefetch=0,
            grid=(1,),                            # single step: whole batch at once
            in_specs=[
                pl.BlockSpec((N, Cin_p, Lflat), lambda i: (0, 0, 0)),
                pl.BlockSpec((3, Cout, K), lambda i: (0, 0, 0)),
                pl.BlockSpec((3, Cout, 1), lambda i: (0, 0, 0)),
            ],
            out_specs=pl.BlockSpec((N, Cout, M_pad), lambda i: (0, 0, 0)),
        ),
        compiler_params=pltpu.CompilerParams(dimension_semantics=("arbitrary",)),
    )(x_flat, wpack, bpack)

    # Channel-major already; drop lane padding, un-flatten rows, drop width halo.
    return out[:, :, :M].reshape(N, Cout, OH, Wp)[:, :, :, :OW]


if __name__ == "__main__":
    # Module config: BBB_Conv2d(in_channels=4, out_channels=8, kernel_size=3,
    #                           stride=1, padding=1, bias=True)
    N, Cin, H, W = 2, 4, 16, 16
    Cout, KH, KW = 8, 3, 3

    key = jax.random.PRNGKey(0)
    keys = jax.random.split(key, 8)

    # posterior_mu_initial = (0, 0.1), posterior_rho_initial = (-3, 0.1)
    x = jax.random.normal(keys[0], (N, Cin, H, W), jnp.float32)
    W_mu = 0.0 + 0.1 * jax.random.normal(keys[1], (Cout, Cin, KH, KW), jnp.float32)
    W_rho = -3.0 + 0.1 * jax.random.normal(keys[2], (Cout, Cin, KH, KW), jnp.float32)
    b_mu = 0.0 + 0.1 * jax.random.normal(keys[3], (Cout,), jnp.float32)
    b_rho = -3.0 + 0.1 * jax.random.normal(keys[4], (Cout,), jnp.float32)
    # eps ~ N(0, 1) (drawn once, shared between kernel and reference)
    W_eps = jax.random.normal(keys[5], (Cout, Cin, KH, KW), jnp.float32)
    b_eps = jax.random.normal(keys[6], (Cout,), jnp.float32)

    out = bbb_conv2d_forward(x, W_mu, W_rho, W_eps, b_mu, b_rho, b_eps, padding=1)
    out = jax.block_until_ready(out)

    # Reference in plain JAX (same math as the PyTorch forward, sample=True).
    weight = W_mu + W_eps * jnp.log1p(jnp.exp(W_rho))
    bias = b_mu + b_eps * jnp.log1p(jnp.exp(b_rho))
    ref = jax.lax.conv_general_dilated(
        x, weight, window_strides=(1, 1), padding=((1, 1), (1, 1)),
        dimension_numbers=("NCHW", "OIHW", "NCHW"),
        precision=jax.lax.Precision.HIGHEST)
    ref = ref + bias[None, :, None, None]

    assert out.shape == (N, Cout, H, W), out.shape
    assert jnp.allclose(out, ref, atol=1e-4, rtol=1e-4), float(jnp.max(jnp.abs(out - ref)))
    print("KERNEL_OK")
</pallas_src>

<mosaic_0001>
module attributes {stable_mosaic.version = 11 : i64} {
  func.func @_bbb_conv2d_kernel(%arg0: i32, %arg1: memref<2x8x342xf32, #tpu.memory_space<vmem>>, %arg2: memref<3x8x72xf32, #tpu.memory_space<vmem>>, %arg3: memref<3x8x1xf32, #tpu.memory_space<vmem>>, %arg4: memref<2x8x384xf32, #tpu.memory_space<vmem>>) attributes {dimension_semantics = [#tpu.dimension_semantics<arbitrary>], iteration_bounds = array<i64: 1>, scalar_prefetch = 0 : i64, scratch_operands = 0 : i64, tpu.core_type = #tpu.core_type<tc>, window_params = [{pipeline_mode = #tpu.pipeline_mode<synchronous>, transform_indices = @transform_0, window_bounds = array<i64: 2, 8, 342>}, {pipeline_mode = #tpu.pipeline_mode<synchronous>, transform_indices = @transform_1, window_bounds = array<i64: 3, 8, 72>}, {pipeline_mode = #tpu.pipeline_mode<synchronous>, transform_indices = @transform_2, window_bounds = array<i64: 3, 8, 1>}, {pipeline_mode = #tpu.pipeline_mode<synchronous>, transform_indices = @transform_3, window_bounds = array<i64: 2, 8, 384>}]} {
    %c0 = arith.constant 0 : index
    %c0_0 = arith.constant 0 : index
    %c0_1 = arith.constant 0 : index
    %0 = vector.load %arg2[%c0, %c0_0, %c0_1] : memref<3x8x72xf32, #tpu.memory_space<vmem>>, vector<1x8x72xf32>
    %1 = vector.shape_cast %0 : vector<1x8x72xf32> to vector<8x72xf32>
    %c2 = arith.constant 2 : index
    %c0_2 = arith.constant 0 : index
    %c0_3 = arith.constant 0 : index
    %2 = vector.load %arg2[%c2, %c0_2, %c0_3] : memref<3x8x72xf32, #tpu.memory_space<vmem>>, vector<1x8x72xf32>
    %3 = vector.shape_cast %2 : vector<1x8x72xf32> to vector<8x72xf32>
    %c1 = arith.constant 1 : index
    %c0_4 = arith.constant 0 : index
    %c0_5 = arith.constant 0 : index
    %4 = vector.load %arg2[%c1, %c0_4, %c0_5] : memref<3x8x72xf32, #tpu.memory_space<vmem>>, vector<1x8x72xf32>
    %5 = vector.shape_cast %4 : vector<1x8x72xf32> to vector<8x72xf32>
    %cst = arith.constant 0.000000e+00 : f32
    %6 = vector.broadcast %cst : f32 to vector<8x72xf32>
    %7 = arith.maximumf %5, %6 : vector<8x72xf32>
    %8 = math.absf %5 : vector<8x72xf32>
    %cst_6 = arith.constant 0.000000e+00 : f32
    %9 = vector.broadcast %cst_6 : f32 to vector<8x72xf32>
    %10 = arith.subf %9, %8 : vector<8x72xf32>
    %11 = math.exp %10 : vector<8x72xf32>
    %12 = math.log1p %11 : vector<8x72xf32>
    %13 = arith.addf %7, %12 : vector<8x72xf32>
    %14 = arith.mulf %3, %13 : vector<8x72xf32>
    %15 = arith.addf %1, %14 : vector<8x72xf32>
    %c0_7 = arith.constant 0 : index
    %c0_8 = arith.constant 0 : index
    %c0_9 = arith.constant 0 : index
    %16 = vector.load %arg3[%c0_7, %c0_8, %c0_9] : memref<3x8x1xf32, #tpu.memory_space<vmem>>, vector<1x8x1xf32>
    %17 = vector.shape_cast %16 : vector<1x8x1xf32> to vector<8x1xf32>
    %c2_10 = arith.constant 2 : index
    %c0_11 = arith.constant 0 : index
    %c0_12 = arith.constant 0 : index
    %18 = vector.load %arg3[%c2_10, %c0_11, %c0_12] : memref<3x8x1xf32, #tpu.memory_space<vmem>>, vector<1x8x1xf32>
    %19 = vector.shape_cast %18 : vector<1x8x1xf32> to vector<8x1xf32>
    %c1_13 = arith.constant 1 : index
    %c0_14 = arith.constant 0 : index
    %c0_15 = arith.constant 0 : index
    %20 = vector.load %arg3[%c1_13, %c0_14, %c0_15] : memref<3x8x1xf32, #tpu.memory_space<vmem>>, vector<1x8x1xf32>
    %21 = vector.shape_cast %20 : vector<1x8x1xf32> to vector<8x1xf32>
    %cst_16 = arith.constant 0.000000e+00 : f32
    %22 = vector.broadcast %cst_16 : f32 to vector<8x1xf32>
    %23 = arith.maximumf %21, %22 : vector<8x1xf32>
    %24 = math.absf %21 : vector<8x1xf32>
    %cst_17 = arith.constant 0.000000e+00 : f32
    %25 = vector.broadcast %cst_17 : f32 to vector<8x1xf32>
    %26 = arith.subf %25, %24 : vector<8x1xf32>
    %27 = math.exp %26 : vector<8x1xf32>
    %28 = math.log1p %27 : vector<8x1xf32>
    %29 = arith.addf %23, %28 : vector<8x1xf32>
    %30 = arith.mulf %19, %29 : vector<8x1xf32>
    %31 = arith.addf %17, %30 : vector<8x1xf32>
    %cst_18 = arith.constant 0.000000e+00 : f32
    %32 = vector.broadcast %cst_18 : f32 to vector<72x96xf32>
    %c0_19 = arith.constant 0 : index
    %c0_20 = arith.constant 0 : index
    %c0_21 = arith.constant 0 : index
    %33 = vector.load %arg1[%c0_19, %c0_20, %c0_21] : memref<2x8x342xf32, #tpu.memory_space<vmem>>, vector<1x8x342xf32>
    %34 = vector.shape_cast %33 : vector<1x8x342xf32> to vector<8x342xf32>
    %35 = vector.extract_strided_slice %34 {offsets = [0, 0], sizes = [8, 288], strides = [1, 1]} : vector<8x342xf32> to vector<8x288xf32>
    %36 = vector.extract_strided_slice %34 {offsets = [0, 1], sizes = [8, 288], strides = [1, 1]} : vector<8x342xf32> to vector<8x288xf32>
    %37 = vector.extract_strided_slice %34 {offsets = [0, 2], sizes = [8, 288], strides = [1, 1]} : vector<8x342xf32> to vector<8x288xf32>
    %38 = vector.extract_strided_slice %34 {offsets = [0, 18], sizes = [8, 288], strides = [1, 1]} : vector<8x342xf32> to vector<8x288xf32>
    %39 = vector.extract_strided_slice %34 {offsets = [0, 19], sizes = [8, 288], strides = [1, 1]} : vector<8x342xf32> to vector<8x288xf32>
    %40 = vector.extract_strided_slice %34 {offsets = [0, 20], sizes = [8, 288], strides = [1, 1]} : vector<8x342xf32> to vector<8x288xf32>
    %41 = vector.extract_strided_slice %34 {offsets = [0, 36], sizes = [8, 288], strides = [1, 1]} : vector<8x342xf32> to vector<8x288xf32>
    %42 = vector.extract_strided_slice %34 {offsets = [0, 37], sizes = [8, 288], strides = [1, 1]} : vector<8x342xf32> to vector<8x288xf32>
    %43 = vector.extract_strided_slice %34 {offsets = [0, 38], sizes = [8, 288], strides = [1, 1]} : vector<8x342xf32> to vector<8x288xf32>
    %44 = tpu.concatenate %35, %36, %37, %38, %39, %40, %41, %42, %43 in 0 : vector<8x288xf32>, vector<8x288xf32>, vector<8x288xf32>, vector<8x288xf32>, vector<8x288xf32>, vector<8x288xf32>, vector<8x288xf32>, vector<8x288xf32>, vector<8x288xf32> -> vector<72x288xf32>
    %c1_22 = arith.constant 1 : index
    %c0_23 = arith.constant 0 : index
    %c0_24 = arith.constant 0 : index
    %45 = vector.load %arg1[%c1_22, %c0_23, %c0_24] : memref<2x8x342xf32, #tpu.memory_space<vmem>>, vector<1x8x342xf32>
    %46 = vector.shape_cast %45 : vector<1x8x342xf32> to vector<8x342xf32>
    %47 = vector.extract_strided_slice %46 {offsets = [0, 0], sizes = [8, 288], strides = [1, 1]} : vector<8x342xf32> to vector<8x288xf32>
    %48 = vector.extract_strided_slice %46 {offsets = [0, 1], sizes = [8, 288], strides = [1, 1]} : vector<8x342xf32> to vector<8x288xf32>
    %49 = vector.extract_strided_slice %46 {offsets = [0, 2], sizes = [8, 288], strides = [1, 1]} : vector<8x342xf32> to vector<8x288xf32>
    %50 = vector.extract_strided_slice %46 {offsets = [0, 18], sizes = [8, 288], strides = [1, 1]} : vector<8x342xf32> to vector<8x288xf32>
    %51 = vector.extract_strided_slice %46 {offsets = [0, 19], sizes = [8, 288], strides = [1, 1]} : vector<8x342xf32> to vector<8x288xf32>
    %52 = vector.extract_strided_slice %46 {offsets = [0, 20], sizes = [8, 288], strides = [1, 1]} : vector<8x342xf32> to vector<8x288xf32>
    %53 = vector.extract_strided_slice %46 {offsets = [0, 36], sizes = [8, 288], strides = [1, 1]} : vector<8x342xf32> to vector<8x288xf32>
    %54 = vector.extract_strided_slice %46 {offsets = [0, 37], sizes = [8, 288], strides = [1, 1]} : vector<8x342xf32> to vector<8x288xf32>
    %55 = vector.extract_strided_slice %46 {offsets = [0, 38], sizes = [8, 288], strides = [1, 1]} : vector<8x342xf32> to vector<8x288xf32>
    %56 = tpu.concatenate %47, %48, %49, %50, %51, %52, %53, %54, %55 in 0 : vector<8x288xf32>, vector<8x288xf32>, vector<8x288xf32>, vector<8x288xf32>, vector<8x288xf32>, vector<8x288xf32>, vector<8x288xf32>, vector<8x288xf32>, vector<8x288xf32> -> vector<72x288xf32>
    %57 = tpu.concatenate %44, %32, %56, %32 in 1 : vector<72x288xf32>, vector<72x96xf32>, vector<72x288xf32>, vector<72x96xf32> -> vector<72x768xf32>
    %cst_25 = arith.constant dense<0.000000e+00> : vector<8x768xf32>
    %58 = tpu.matmul %15, %57, %cst_25 {dimension_numbers = #tpu.dot_dimension_numbers<[1], [0], [0], [1], [0, 0, 1, 1], [], []>} : vector<8x72xf32>, vector<72x768xf32>, vector<8x768xf32> -> vector<8x768xf32>
    %59 = vector.broadcast %31 : vector<8x1xf32> to vector<8x768xf32>
    %60 = arith.addf %58, %59 : vector<8x768xf32>
    %61 = vector.extract_strided_slice %60 {offsets = [0, 0], sizes = [8, 384], strides = [1, 1]} : vector<8x768xf32> to vector<8x384xf32>
    %c0_26 = arith.constant 0 : index
    %c0_27 = arith.constant 0 : index
    %c0_28 = arith.constant 0 : index
    %62 = vector.load %arg4[%c0_26, %c0_27, %c0_28] : memref<2x8x384xf32, #tpu.memory_space<vmem>>, vector<1x8x384xf32>
    %63 = vector.shape_cast %62 : vector<1x8x384xf32> to vector<8x384xf32>
    %64 = vector.shape_cast %61 : vector<8x384xf32> to vector<1x8x384xf32>
    tpu.vector_store %arg4[%c0_26, %c0_27, %c0_28], %64 {strides = array<i32>} : memref<2x8x384xf32, #tpu.memory_space<vmem>>, vector<1x8x384xf32>,
    %65 = vector.extract_strided_slice %60 {offsets = [0, 384], sizes = [8, 384], strides = [1, 1]} : vector<8x768xf32> to vector<8x384xf32>
    %c1_29 = arith.constant 1 : index
    %c0_30 = arith.constant 0 : index
    %c0_31 = arith.constant 0 : index
    %66 = vector.load %arg4[%c1_29, %c0_30, %c0_31] : memref<2x8x384xf32, #tpu.memory_space<vmem>>, vector<1x8x384xf32>
    %67 = vector.shape_cast %66 : vector<1x8x384xf32> to vector<8x384xf32>
    %68 = vector.shape_cast %65 : vector<8x384xf32> to vector<1x8x384xf32>
    tpu.vector_store %arg4[%c1_29, %c0_30, %c0_31], %68 {strides = array<i32>} : memref<2x8x384xf32, #tpu.memory_space<vmem>>, vector<1x8x384xf32>,
    return
  }
  func.func @transform_0(%arg0: i32) -> (i32, i32, i32) {
    %c0_i32 = arith.constant 0 : i32
    %c0_i32_0 = arith.constant 0 : i32
    %c0_i32_1 = arith.constant 0 : i32
    %c0_i32_2 = arith.constant 0 : i32
    return %c0_i32, %c0_i32_0, %c0_i32_1 : i32, i32, i32
  }
  func.func @transform_1(%arg0: i32) -> (i32, i32, i32) {
    %c0_i32 = arith.constant 0 : i32
    %c0_i32_0 = arith.constant 0 : i32
    %c0_i32_1 = arith.constant 0 : i32
    %c0_i32_2 = arith.constant 0 : i32
    return %c0_i32, %c0_i32_0, %c0_i32_1 : i32, i32, i32
  }
  func.func @transform_2(%arg0: i32) -> (i32, i32, i32) {
    %c0_i32 = arith.constant 0 : i32
    %c0_i32_0 = arith.constant 0 : i32
    %c0_i32_1 = arith.constant 0 : i32
    %c0_i32_2 = arith.constant 0 : i32
    return %c0_i32, %c0_i32_0, %c0_i32_1 : i32, i32, i32
  }
  func.func @transform_3(%arg0: i32) -> (i32, i32, i32) {
    %c0_i32 = arith.constant 0 : i32
    %c0_i32_0 = arith.constant 0 : i32
    %c0_i32_1 = arith.constant 0 : i32
    %c0_i32_2 = arith.constant 0 : i32
    return %c0_i32, %c0_i32_0, %c0_i32_1 : i32, i32, i32
  }
}

</mosaic_0001>

<llo_original>
// kernel: tpu_custom_call.1
$region0: #{tpu_custom_call.1}
  #allocation0 [shape = 'u32[]', space=smem, size = 0x4, offset = 0x4, fixed_abs, tag = 'smem constant byte address 0x4 - core index']
  #allocation1 [shape = 'u32[144,128]{1,0:T(1,128)}', space=vmem, size = 0x12000, scoped, tag = 'internal scratch']
  %s0 = inlined_call_operand.hbm [shape: f32[2,8,342], index: 0, kind: input, shape index: {}]
  %s1 = inlined_call_operand.vmem [shape: f32[3,8,72], index: 1, kind: input, shape index: {}]
  %s2 = inlined_call_operand.vmem [shape: f32[3,8,1], index: 2, kind: input, shape index: {}]
  %s3 = inlined_call_operand.hbm [shape: f32[2,8,384], index: 3, kind: output, shape index: {}]
  %s4 = sld [smem:[#allocation0]]
  $region26: #{tpu_custom_call.1} parent=0
    _
  %s6 = ssub.s32 1, %s4
  %s7 = scalar_select 0, %s6, %s4
  $region1: #{tpu_custom_call.1} parent=0
    #allocation2 [shape = 'u8[24576]{0}', space=vmem, size = 0x6000, scoped, tag = 'input window, operand 0, single buffered']
    #allocation3 [shape = 's32[1]{0}', space=sflag, size = 0x4, scoped, tag = 'scoped memory for tpu_custom_call.1']
    #allocation4 [shape = 's32[1]{0}', space=sflag, size = 0x4, scoped, tag = 'scoped memory for tpu_custom_call.1']
    #allocation5 [shape = 'u8[24576]{0}', space=vmem, size = 0x6000, scoped, tag = 'output window, operand 0, single buffered']
    %8 = vsyncpa [#allocation3], 0
    %9 = vsyncpa [#allocation4], 0
    // Predicated region
    $region2: #{tpu_custom_call.1} parent=1 // pred_check
      _
    $region3: #{tpu_custom_call.1} parent=1 // pred_check_branch
      %11 = sbr.rel (0) target = $region5
    $region4: #{tpu_custom_call.1} parent=1 // pred_region
      %s13 = ssub.s32 768, 768
      %14 = vsyncadd [#allocation3], %s13
      %s15 = sshll.u32 [#allocation2], 4
      %s16 = int_to_ptr.vmem [resolvable:$true] %s15
      %21 = dma.hbm_to_vmem [thread:$0]  %s0, 768, %s16, [#allocation3], 384, 384, 24
    $region5: #{tpu_custom_call.1} parent=1 // pred_fallthru
      _
    // Predicated region
    $region6: #{tpu_custom_call.1} parent=1 // pred_check
      _
    $region7: #{tpu_custom_call.1} parent=1 // pred_check_branch
      %23 = sbr.rel (0) target = $region9
    $region8: #{tpu_custom_call.1} parent=1 // pred_region
      _
    $region9: #{tpu_custom_call.1} parent=1 // pred_fallthru
      _
    // Predicated region
    $region10: #{tpu_custom_call.1} parent=1 // pred_check
      _
    $region11: #{tpu_custom_call.1} parent=1 // pred_check_branch
      %25 = sbr.rel (0) target = $region13
    $region12: #{tpu_custom_call.1} parent=1 // pred_region
      _
    $region13: #{tpu_custom_call.1} parent=1 // pred_fallthru
      _
    // Predicated region
    $region14: #{tpu_custom_call.1} parent=1 // pred_check
      _
    $region15: #{tpu_custom_call.1} parent=1 // pred_check_branch
      %27 = sbr.rel (0) target = $region17
    $region16: #{tpu_custom_call.1} parent=1 // pred_region
      %28 = dma.done [#allocation3], 768
    $region17: #{tpu_custom_call.1} parent=1 // pred_fallthru
      _
    %v29 = vld [vmem:[%s1] sm:$0xff]
    %s30 = scalar_lea.vmem %s1, 16
    %v31 = vld [vmem:[%s30] sm:$0xff]
    %s32 = scalar_lea.vmem %s1, 8
    %v33 = vld [vmem:[%s32] sm:$0xff]
    %v34 = vmax.f32 %v33, 0.0
    %v35 = vand.u32 2147483647, %v33
    %v36 = vsub.f32 0.0, %v35
    %v37 = vmul.f32 %v36, 1.442695
    %v38 = vpow.pop %v37
    %v39 = vadd.f32 %v38, 1.0
    %v40 = vlog2.pop %v39
    %v41 = vmul.f32 %v40, 0.6931472
    %v42 = vmul.f32 -0.5, %v38
    %v43 = vadd.f32 %v42, 1.0
    %v44 = vmul.f32 %v43, %v38
    %v45 = vand.u32 2147483647, %v38
    %vm46 = vcmp.lt.f32.partialorder %v45, 0.0004427343
    %v47 = vsel %vm46, %v44, %v41
    %v48 = vadd.f32 %v34, %v47
    %v49 = vmul.f32 %v31, %v48
    %v50 = vadd.f32 %v29, %v49
    %v51 = vld [vmem:[%s2] sm:$0xff]
    %s52 = scalar_lea.vmem %s2, 16
    %v53 = vld [vmem:[%s52] sm:$0xff]
    %s54 = scalar_lea.vmem %s2, 8
    %v55 = vld [vmem:[%s54] sm:$0xff]
    %v56 = vmax.f32 %v55, 0.0
    %v57 = vand.u32 2147483647, %v55
    %v58 = vsub.f32 0.0, %v57
    %v59 = vmul.f32 %v58, 1.442695
    %v60 = vpow.pop %v59
    %v61 = vadd.f32 %v60, 1.0
    %v62 = vlog2.pop %v61
    %v63 = vmul.f32 %v62, 0.6931472
    %v64 = vmul.f32 -0.5, %v60
    %v65 = vadd.f32 %v64, 1.0
    %v66 = vmul.f32 %v65, %v60
    %v67 = vand.u32 2147483647, %v60
    %vm68 = vcmp.lt.f32.partialorder %v67, 0.0004427343
    %v69 = vsel %vm68, %v66, %v63
    %v70 = vadd.f32 %v56, %v69
    %v71 = vmul.f32 %v53, %v70
    %v72 = vadd.f32 %v51, %v71
    %v73 = vld [vmem:[#allocation2] sm:$0xff]
    %v74 = vld [vmem:[#allocation2 + $0x8] sm:$0xff]
    %v75 = vld [vmem:[#allocation2 + $0x10] sm:$0xff]
    %79 = vrot.lane.b32.xlu0 %v73, 127
    %v80 = vpop.permute.xlu0 %79
    %81 = vrot.lane.b32.xlu0 %v74, 127
    %v82 = vpop.permute.xlu0 %81
    %83 = vrot.lane.b32.xlu0 %v75, 127
    %v84 = vpop.permute.xlu0 %83
    %vm85 = vcmask 1039360
    %v86 = vsel %vm85, %v80, %v82
    %v87 = vsel %vm85, %v82, %v84
    %91 = vrot.lane.b32.xlu0 %v73, 126
    %v92 = vpop.permute.xlu0 %91
    %93 = vrot.lane.b32.xlu0 %v74, 126
    %v94 = vpop.permute.xlu0 %93
    %95 = vrot.lane.b32.xlu0 %v75, 126
    %v96 = vpop.permute.xlu0 %95
    %vm97 = vcmask 1031168
    %v98 = vsel %vm97, %v92, %v94
    %v99 = vsel %vm97, %v94, %v96
    %103 = vrot.lane.b32.xlu0 %v73, 110
    %v104 = vpop.permute.xlu0 %103
    %105 = vrot.lane.b32.xlu0 %v74, 110
    %v106 = vpop.permute.xlu0 %105
    %107 = vrot.lane.b32.xlu0 %v75, 110
    %v108 = vpop.permute.xlu0 %107
    %vm109 = vcmask 900096
    %v110 = vsel %vm109, %v104, %v106
    %v111 = vsel %vm109, %v106, %v108
    %115 = vrot.lane.b32.xlu0 %v73, 109
    %v116 = vpop.permute.xlu0 %115
    %117 = vrot.lane.b32.xlu0 %v74, 109
    %v118 = vpop.permute.xlu0 %117
    %119 = vrot.lane.b32.xlu0 %v75, 109
    %v120 = vpop.permute.xlu0 %119
    %vm121 = vcmask 891904
    %v122 = vsel %vm121, %v116, %v118
    %v123 = vsel %vm121, %v118, %v120
    %127 = vrot.lane.b32.xlu0 %v73, 108
    %v128 = vpop.permute.xlu0 %127
    %129 = vrot.lane.b32.xlu0 %v74, 108
    %v130 = vpop.permute.xlu0 %129
    %131 = vrot.lane.b32.xlu0 %v75, 108
    %v132 = vpop.permute.xlu0 %131
    %vm133 = vcmask 883712
    %v134 = vsel %vm133, %v128, %v130
    %v135 = vsel %vm133, %v130, %v132
    %139 = vrot.lane.b32.xlu0 %v73, 92
    %v140 = vpop.permute.xlu0 %139
    %141 = vrot.lane.b32.xlu0 %v74, 92
    %v142 = vpop.permute.xlu0 %141
    %143 = vrot.lane.b32.xlu0 %v75, 92
    %v144 = vpop.permute.xlu0 %143
    %vm145 = vcmask 752640
    %v146 = vsel %vm145, %v140, %v142
    %v147 = vsel %vm145, %v142, %v144
    %151 = vrot.lane.b32.xlu0 %v73, 91
    %v152 = vpop.permute.xlu0 %151
    %153 = vrot.lane.b32.xlu0 %v74, 91
    %v154 = vpop.permute.xlu0 %153
    %155 = vrot.lane.b32.xlu0 %v75, 91
    %v156 = vpop.permute.xlu0 %155
    %vm157 = vcmask 744448
    %v158 = vsel %vm157, %v152, %v154
    %v159 = vsel %vm157, %v154, %v156
    %163 = vrot.lane.b32.xlu0 %v73, 90
    %v164 = vpop.permute.xlu0 %163
    %165 = vrot.lane.b32.xlu0 %v74, 90
    %v166 = vpop.permute.xlu0 %165
    %167 = vrot.lane.b32.xlu0 %v75, 90
    %v168 = vpop.permute.xlu0 %167
    %vm169 = vcmask 736256
    %v170 = vsel %vm169, %v164, %v166
    %v171 = vsel %vm169, %v166, %v168
    %s175 = scalar_lea.vmem [#allocation2], 24
    %v176 = vld [vmem:[%s175] sm:$0xff]
    %v177 = vld [vmem:[%s175 + $0x8] sm:$0xff]
    %v178 = vld [vmem:[%s175 + $0x10] sm:$0xff]
    %182 = vrot.lane.b32.xlu0 %v176, 127
    %v183 = vpop.permute.xlu0 %182
    %184 = vrot.lane.b32.xlu0 %v177, 127
    %v185 = vpop.permute.xlu0 %184
    %186 = vrot.lane.b32.xlu0 %v178, 127
    %v187 = vpop.permute.xlu0 %186
    %v188 = vsel %vm85, %v183, %v185
    %v189 = vsel %vm85, %v185, %v187
    %193 = vrot.lane.b32.xlu0 %v176, 126
    %v194 = vpop.permute.xlu0 %193
    %195 = vrot.lane.b32.xlu0 %v177, 126
    %v196 = vpop.permute.xlu0 %195
    %197 = vrot.lane.b32.xlu0 %v178, 126
    %v198 = vpop.permute.xlu0 %197
    %v199 = vsel %vm97, %v194, %v196
    %v200 = vsel %vm97, %v196, %v198
    %204 = vrot.lane.b32.xlu0 %v176, 110
    %v205 = vpop.permute.xlu0 %204
    %206 = vrot.lane.b32.xlu0 %v177, 110
    %v207 = vpop.permute.xlu0 %206
    %208 = vrot.lane.b32.xlu0 %v178, 110
    %v209 = vpop.permute.xlu0 %208
    %v210 = vsel %vm109, %v205, %v207
    %v211 = vsel %vm109, %v207, %v209
    %215 = vrot.lane.b32.xlu0 %v176, 109
    %v216 = vpop.permute.xlu0 %215
    %217 = vrot.lane.b32.xlu0 %v177, 109
    %v218 = vpop.permute.xlu0 %217
    %219 = vrot.lane.b32.xlu0 %v178, 109
    %v220 = vpop.permute.xlu0 %219
    %v221 = vsel %vm121, %v216, %v218
    %v222 = vsel %vm121, %v218, %v220
    %226 = vrot.lane.b32.xlu0 %v176, 108
    %v227 = vpop.permute.xlu0 %226
    %228 = vrot.lane.b32.xlu0 %v177, 108
    %v229 = vpop.permute.xlu0 %228
    %230 = vrot.lane.b32.xlu0 %v178, 108
    %v231 = vpop.permute.xlu0 %230
    %v232 = vsel %vm133, %v227, %v229
    %v233 = vsel %vm133, %v229, %v231
    %237 = vrot.lane.b32.xlu0 %v176, 92
    %v238 = vpop.permute.xlu0 %237
    %239 = vrot.lane.b32.xlu0 %v177, 92
    %v240 = vpop.permute.xlu0 %239
    %241 = vrot.lane.b32.xlu0 %v178, 92
    %v242 = vpop.permute.xlu0 %241
    %v243 = vsel %vm145, %v238, %v240
    %v244 = vsel %vm145, %v240, %v242
    %248 = vrot.lane.b32.xlu0 %v176, 91
    %v249 = vpop.permute.xlu0 %248
    %250 = vrot.lane.b32.xlu0 %v177, 91
    %v251 = vpop.permute.xlu0 %250
    %252 = vrot.lane.b32.xlu0 %v178, 91
    %v253 = vpop.permute.xlu0 %252
    %v254 = vsel %vm157, %v249, %v251
    %v255 = vsel %vm157, %v251, %v253
    %259 = vrot.lane.b32.xlu0 %v176, 90
    %v260 = vpop.permute.xlu0 %259
    %261 = vrot.lane.b32.xlu0 %v177, 90
    %v262 = vpop.permute.xlu0 %261
    %263 = vrot.lane.b32.xlu0 %v178, 90
    %v264 = vpop.permute.xlu0 %263
    %v265 = vsel %vm169, %v260, %v262
    %v266 = vsel %vm169, %v262, %v264
    %vm270 = vcmask 261120
    %v271 = vsel %vm270, %v75, 0.0
    %v272 = vsel %vm270, %v84, 0.0
    %v273 = vsel %vm270, %v96, 0.0
    %v274 = vsel %vm270, %v108, 0.0
    %v275 = vsel %vm270, %v120, 0.0
    %v276 = vsel %vm270, %v132, 0.0
    %v277 = vsel %vm270, %v144, 0.0
    %v278 = vsel %vm270, %v156, 0.0
    %v279 = vsel %vm270, %v168, 0.0
    %v280 = vsel %vm270, %v178, 0.0
    %v281 = vsel %vm270, %v187, 0.0
    %v282 = vsel %vm270, %v198, 0.0
    %v283 = vsel %vm270, %v209, 0.0
    %v284 = vsel %vm270, %v220, 0.0
    %v285 = vsel %vm270, %v231, 0.0
    %v286 = vsel %vm270, %v242, 0.0
    %v287 = vsel %vm270, %v253, 0.0
    %v288 = vsel %vm270, %v264, 0.0
    %290 = vset.pattern.permute.xlu0 0
    %291 = vperm.xlu0 %290, %v72
    %v292 = vpop.permute.xlu0 %291
    %vm294 = vcmask 588800
    %v296 = vsel %vm294, %v50, 0
    %298 = vmatprep.subr.mxu0 0.0
    %299 = vmatpush1.msra.mxu0 0.0
    %300 = vmatprep.subr.mxu0 0.0
    %301 = vmatpush1.msra.mxu0 0.0
    %302 = vmatprep.subr.mxu0 0.0
    %303 = vmatpush1.msra.mxu0 0.0
    %304 = vmatprep.subr.mxu0 0.0
    %305 = vmatpush1.msra.mxu0 0.0
    %306 = vmatprep.subr.mxu0 0.0
    %307 = vmatpush1.msra.mxu0 0.0
    %308 = vmatprep.subr.mxu0 0.0
    %309 = vmatpush1.msra.mxu0 0.0
    %310 = vmatprep.subr.mxu0 0.0
    %311 = vmatpush1.msra.mxu0 0.0
    %312 = vmatprep.subr.mxu0 %v171
    %313 = vmatpush1.msra.mxu0 %v170
    %314 = vmatprep.subr.mxu0 %v159
    %315 = vmatpush1.msra.mxu0 %v158
    %316 = vmatprep.subr.mxu0 %v147
    %317 = vmatpush1.msra.mxu0 %v146
    %318 = vmatprep.subr.mxu0 %v135
    %319 = vmatpush1.msra.mxu0 %v134
    %320 = vmatprep.subr.mxu0 %v123
    %321 = vmatpush1.msra.mxu0 %v122
    %322 = vmatprep.subr.mxu0 %v111
    %323 = vmatpush1.msra.mxu0 %v110
    %324 = vmatprep.subr.mxu0 %v99
    %325 = vmatpush1.msra.mxu0 %v98
    %326 = vmatprep.subr.mxu0 %v87
    %327 = vmatpush1.msra.mxu0 %v86
    %328 = vmatprep.subr.mxu0 %v74
    %329 = vmatpush1.msra.mxu0 %v73
    %330 = vmatprep.subr.mxu0 0.0
    %331 = vmatpush2.msra.mxu0 0.0
    %332 = vmatprep.subr.mxu0 0.0
    %333 = vmatpush2.msra.mxu0 0.0
    %334 = vmatprep.subr.mxu0 0.0
    %335 = vmatpush2.msra.mxu0 0.0
    %336 = vmatprep.subr.mxu0 0.0
    %337 = vmatpush2.msra.mxu0 0.0
    %338 = vmatprep.subr.mxu0 0.0
    %339 = vmatpush2.msra.mxu0 0.0
    %340 = vmatprep.subr.mxu0 0.0
    %341 = vmatpush2.msra.mxu0 0.0
    %342 = vmatprep.subr.mxu0 0.0
    %343 = vmatpush2.msra.mxu0 0.0
    %344 = vmatprep.subr.mxu0 0.0
    %345 = vmatpush2.msra.mxu0 0.0
    %346 = vmatprep.subr.mxu0 0.0
    %347 = vmatpush2.msra.mxu0 0.0
    %348 = vmatprep.subr.mxu0 0.0
    %349 = vmatpush2.msra.mxu0 0.0
    %350 = vmatprep.subr.mxu0 0.0
    %351 = vmatpush2.msra.mxu0 0.0
    %352 = vmatprep.subr.mxu0 0.0
    %353 = vmatpush2.msra.mxu0 0.0
    %354 = vmatprep.subr.mxu0 0.0
    %355 = vmatpush2.msra.mxu0 0.0
    %356 = vmatprep.subr.mxu0 0.0
    %357 = vmatpush2.msra.mxu0 0.0
    %358 = vmatprep.subr.mxu0 0.0
    %359 = vmatpush2.msra.mxu0 0.0
    %360 = vmatprep.subr.mxu0 0.0
    %361 = vmatpush2.msra.mxu0 0.0
    %362 = vmatprep.mubr.f32.mxu0 0.0
    %363 = vmatmul.mubr.f32.gmra.mxu0 %v296
    %v364 = vpop.f32.mrf.mxu0
    %v365 = vadd.f32 %v292, %v364
    %v366 = vpop.f32.mrf.mxu0
    %v367 = vadd.f32 %v292, %v366
    %368 = vdwg.mxu0
    %369 = vmatprep.subr.mxu0 0.0
    %370 = vmatpush1.msra.mxu0 0.0
    %371 = vmatprep.subr.mxu0 0.0
    %372 = vmatpush1.msra.mxu0 0.0
    %373 = vmatprep.subr.mxu0 0.0
    %374 = vmatpush1.msra.mxu0 0.0
    %375 = vmatprep.subr.mxu0 0.0
    %376 = vmatpush1.msra.mxu0 0.0
    %377 = vmatprep.subr.mxu0 0.0
    %378 = vmatpush1.msra.mxu0 0.0
    %379 = vmatprep.subr.mxu0 0.0
    %380 = vmatpush1.msra.mxu0 0.0
    %381 = vmatprep.subr.mxu0 0.0
    %382 = vmatpush1.msra.mxu0 0.0
    %383 = vmatprep.subr.mxu0 %v265
    %384 = vmatpush1.msra.mxu0 %v279
    %385 = vmatprep.subr.mxu0 %v254
    %386 = vmatpush1.msra.mxu0 %v278
    %387 = vmatprep.subr.mxu0 %v243
    %388 = vmatpush1.msra.mxu0 %v277
    %389 = vmatprep.subr.mxu0 %v232
    %390 = vmatpush1.msra.mxu0 %v276
    %391 = vmatprep.subr.mxu0 %v221
    %392 = vmatpush1.msra.mxu0 %v275
    %393 = vmatprep.subr.mxu0 %v210
    %394 = vmatpush1.msra.mxu0 %v274
    %395 = vmatprep.subr.mxu0 %v199
    %396 = vmatpush1.msra.mxu0 %v273
    %397 = vmatprep.subr.mxu0 %v188
    %398 = vmatpush1.msra.mxu0 %v272
    %399 = vmatprep.subr.mxu0 %v176
    %400 = vmatpush1.msra.mxu0 %v271
    %401 = vmatprep.subr.mxu0 0.0
    %402 = vmatpush2.msra.mxu0 0.0
    %403 = vmatprep.subr.mxu0 0.0
    %404 = vmatpush2.msra.mxu0 0.0
    %405 = vmatprep.subr.mxu0 0.0
    %406 = vmatpush2.msra.mxu0 0.0
    %407 = vmatprep.subr.mxu0 0.0
    %408 = vmatpush2.msra.mxu0 0.0
    %409 = vmatprep.subr.mxu0 0.0
    %410 = vmatpush2.msra.mxu0 0.0
    %411 = vmatprep.subr.mxu0 0.0
    %412 = vmatpush2.msra.mxu0 0.0
    %413 = vmatprep.subr.mxu0 0.0
    %414 = vmatpush2.msra.mxu0 0.0
    %415 = vmatprep.subr.mxu0 0.0
    %416 = vmatpush2.msra.mxu0 0.0
    %417 = vmatprep.subr.mxu0 0.0
    %418 = vmatpush2.msra.mxu0 0.0
    %419 = vmatprep.subr.mxu0 0.0
    %420 = vmatpush2.msra.mxu0 0.0
    %421 = vmatprep.subr.mxu0 0.0
    %422 = vmatpush2.msra.mxu0 0.0
    %423 = vmatprep.subr.mxu0 0.0
    %424 = vmatpush2.msra.mxu0 0.0
    %425 = vmatprep.subr.mxu0 0.0
    %426 = vmatpush2.msra.mxu0 0.0
    %427 = vmatprep.subr.mxu0 0.0
    %428 = vmatpush2.msra.mxu0 0.0
    %429 = vmatprep.subr.mxu0 0.0
    %430 = vmatpush2.msra.mxu0 0.0
    %431 = vmatprep.subr.mxu0 0.0
    %432 = vmatpush2.msra.mxu0 0.0
    %433 = vmatprep.mubr.f32.mxu0 0.0
    %434 = vmatmul.mubr.f32.gmra.mxu0 %v296
    %v435 = vpop.f32.mrf.mxu0
    %v436 = vadd.f32 %v292, %v435
    %v437 = vpop.f32.mrf.mxu0
    %v438 = vadd.f32 %v292, %v437
    %439 = vdwg.mxu0
    %440 = vmatprep.subr.mxu0 0.0
    %441 = vmatpush1.msra.mxu0 0.0
    %442 = vmatprep.subr.mxu0 0.0
    %443 = vmatpush1.msra.mxu0 0.0
    %444 = vmatprep.subr.mxu0 0.0
    %445 = vmatpush1.msra.mxu0 0.0
    %446 = vmatprep.subr.mxu0 0.0
    %447 = vmatpush1.msra.mxu0 0.0
    %448 = vmatprep.subr.mxu0 0.0
    %449 = vmatpush1.msra.mxu0 0.0
    %450 = vmatprep.subr.mxu0 0.0
    %451 = vmatpush1.msra.mxu0 0.0
    %452 = vmatprep.subr.mxu0 0.0
    %453 = vmatpush1.msra.mxu0 0.0
    %454 = vmatprep.subr.mxu0 %v288
    %455 = vmatpush1.msra.mxu0 %v266
    %456 = vmatprep.subr.mxu0 %v287
    %457 = vmatpush1.msra.mxu0 %v255
    %458 = vmatprep.subr.mxu0 %v286
    %459 = vmatpush1.msra.mxu0 %v244
    %460 = vmatprep.subr.mxu0 %v285
    %461 = vmatpush1.msra.mxu0 %v233
    %462 = vmatprep.subr.mxu0 %v284
    %463 = vmatpush1.msra.mxu0 %v222
    %464 = vmatprep.subr.mxu0 %v283
    %465 = vmatpush1.msra.mxu0 %v211
    %466 = vmatprep.subr.mxu0 %v282
    %467 = vmatpush1.msra.mxu0 %v200
    %468 = vmatprep.subr.mxu0 %v281
    %469 = vmatpush1.msra.mxu0 %v189
    %470 = vmatprep.subr.mxu0 %v280
    %471 = vmatpush1.msra.mxu0 %v177
    %472 = vmatprep.subr.mxu0 0.0
    %473 = vmatpush2.msra.mxu0 0.0
    %474 = vmatprep.subr.mxu0 0.0
    %475 = vmatpush2.msra.mxu0 0.0
    %476 = vmatprep.subr.mxu0 0.0
    %477 = vmatpush2.msra.mxu0 0.0
    %478 = vmatprep.subr.mxu0 0.0
    %479 = vmatpush2.msra.mxu0 0.0
    %480 = vmatprep.subr.mxu0 0.0
    %481 = vmatpush2.msra.mxu0 0.0
    %482 = vmatprep.subr.mxu0 0.0
    %483 = vmatpush2.msra.mxu0 0.0
    %484 = vmatprep.subr.mxu0 0.0
    %485 = vmatpush2.msra.mxu0 0.0
    %486 = vmatprep.subr.mxu0 0.0
    %487 = vmatpush2.msra.mxu0 0.0
    %488 = vmatprep.subr.mxu0 0.0
    %489 = vmatpush2.msra.mxu0 0.0
    %490 = vmatprep.subr.mxu0 0.0
    %491 = vmatpush2.msra.mxu0 0.0
    %492 = vmatprep.subr.mxu0 0.0
    %493 = vmatpush2.msra.mxu0 0.0
    %494 = vmatprep.subr.mxu0 0.0
    %495 = vmatpush2.msra.mxu0 0.0
    %496 = vmatprep.subr.mxu0 0.0
    %497 = vmatpush2.msra.mxu0 0.0
    %498 = vmatprep.subr.mxu0 0.0
    %499 = vmatpush2.msra.mxu0 0.0
    %500 = vmatprep.subr.mxu0 0.0
    %501 = vmatpush2.msra.mxu0 0.0
    %502 = vmatprep.subr.mxu0 0.0
    %503 = vmatpush2.msra.mxu0 0.0
    %504 = vmatprep.mubr.f32.mxu0 0.0
    %505 = vmatmul.mubr.f32.gmra.mxu0 %v296
    %v506 = vpop.f32.mrf.mxu0
    %v507 = vadd.f32 %v292, %v506
    %v508 = vpop.f32.mrf.mxu0
    %v509 = vadd.f32 %v292, %v508
    %510 = vdwg.mxu0
    %511 = vst [vmem:[#allocation5] sm:$0xff] %v365
    %512 = vst [vmem:[#allocation5 + $0x8] sm:$0xff] %v367
    %513 = vst [vmem:[#allocation5 + $0x10] sm:$0xff] %v436
    %s514 = scalar_lea.vmem [#allocation5], 24
    %515 = vst [vmem:[%s514] sm:$0xff] %v438
    %516 = vst [vmem:[%s514 + $0x8] sm:$0xff] %v507
    %517 = vst [vmem:[%s514 + $0x10] sm:$0xff] %v509
    // Predicated region
    $region18: #{tpu_custom_call.1} parent=1 // pred_check
      _
    $region19: #{tpu_custom_call.1} parent=1 // pred_check_branch
      %519 = sbr.rel (0) target = $region21
    $region20: #{tpu_custom_call.1} parent=1 // pred_region
      %s521 = ssub.s32 768, 768
      %522 = vsyncadd [#allocation4], %s521
      %s523 = sshll.u32 [#allocation5], 4
      %s524 = int_to_ptr.vmem [resolvable:$true] %s523
      %529 = dma.vmem_to_hbm [thread:$0]  %s524, 768, %s3, [#allocation4], 384, 384, 24
    $region21: #{tpu_custom_call.1} parent=1 // pred_fallthru
      _
    // Predicated region
    $region22: #{tpu_custom_call.1} parent=1 // pred_check
      _
    $region23: #{tpu_custom_call.1} parent=1 // pred_check_branch
      %531 = sbr.rel (0) target = $region25
    $region24: #{tpu_custom_call.1} parent=1 // pred_region
      %532 = dma.done [#allocation4], 768
    $region25: #{tpu_custom_call.1} parent=1 // pred_fallthru
      _
    %533 = vsyncpa [#allocation3], 1
    %534 = vsyncpa [#allocation4], 1

</llo_original>
